<compile_context>
chip_gen: v6e
topology: v6e:2x2x1
jax: 0.10.0
libtpu: 0.0.40
codegen_flags: <defaults>
</compile_context>

<pallas_src>
import jax
import jax.numpy as jnp
from jax.experimental import pallas as pl
from jax.experimental.pallas import tpu as pltpu


# ----------------------------------------------------------------------------
# Kernel
# ----------------------------------------------------------------------------
def _highway_kernel(x_ref, w_ref, b_ref, o_ref):
    x = x_ref[...]                                  # (TM, D) input tile (f32)
    D = x.shape[1]

    # Single wide MXU matmul for both branches:
    #   (TM, D) @ (D, 2D) -> (TM, 2D), f32 accumulation.
    # w_ref is already in canonical (K, N) layout (pre-transposed in the
    # wrapper) and typically bf16; cast x to the weight dtype for the MXU.
    y = jnp.dot(x.astype(w_ref.dtype), w_ref[...],
                preferred_element_type=jnp.float32)
    y = y + b_ref[...].astype(jnp.float32)          # (1, 2D) broadcast, f32

    t = jnp.maximum(y[:, :D], 0.0)                  # transform branch: relu
    g = jax.nn.sigmoid(y[:, D:])                    # gate branch: sigmoid

    xf = x.astype(jnp.float32)
    # g*t + (1-g)*x  ==  x + g*(t - x)   (saves one vmul/element)
    o_ref[...] = (xf + g * (t - xf)).astype(o_ref.dtype)


# ----------------------------------------------------------------------------
# Parameter fusion (one-time, hoisted out of the per-call path)
# ----------------------------------------------------------------------------
def prepare_highway_params(w_t, b_t, w_g, b_g, *, compute_dtype=jnp.bfloat16):
    """Fuse the transform/gate Linear parameters once.

    w_t, w_g : (D, D) PyTorch-layout (out_features, in_features)
    b_t, b_g : (D,)

    Returns:
      w_fused : (D, 2D) = [Wt^T | Wg^T], canonical (K, N) MXU layout, cast to
                `compute_dtype` (bf16 by default: MXU-native, half the VMEM).
      b_fused : (1, 2D) float32 (bias is added after the f32 accumulation).
    """
    w_fused = jnp.concatenate([w_t.T, w_g.T], axis=1).astype(compute_dtype)
    b_fused = jnp.concatenate([b_t, b_g]).reshape(1, -1).astype(jnp.float32)
    return w_fused, b_fused


# ----------------------------------------------------------------------------
# Tile / VMEM sizing
# ----------------------------------------------------------------------------
def _round_up(x, m):
    return ((x + m - 1) // m) * m


def _vmem_capacity_bytes():
    try:
        info = pltpu.get_tpu_info()
        cap = getattr(info, "vmem_capacity_bytes", None)
        if cap:
            return int(cap)
    except Exception:
        pass
    return 64 * 1024 * 1024  # conservative default (v7x per-TensorCore VMEM)


def _choose_tile_and_vmem(M, D, weight_bytes, bias_bytes):
    cap = _vmem_capacity_bytes()
    # ~88% of physical VMEM, capped at 110 MiB (v5e/v6e have 128 MiB, v7x 64).
    vmem_limit = max(32 * 1024 * 1024, min(int(0.88 * cap), 110 * 1024 * 1024))

    # Per-row VMEM cost estimate (bytes), f32 activations:
    #   x tile (2 buffers) + out tile (2 buffers) : 4*D*4
    #   y temp (TM, 2D) f32 + bf16-x / t / g temps: ~4*D*4
    per_row = 32 * D
    # Assume weights may be double-buffered (fallback path) + small headroom.
    budget = vmem_limit - 2 * (weight_bytes + bias_bytes) - (4 << 20)
    tm = budget // per_row if budget > 0 else 256
    tm = max(256, min(1024, (tm // 256) * 256))     # multiple of 256 in [256, 1024]

    if M <= tm:
        # Split rows into >= 2 tiles so a megacore chip (v7x) can use both
        # TensorCores; keep 256-row MXU alignment when rows permit.
        half = pl.cdiv(M, 2)
        tm = _round_up(half, 256) if half >= 256 else _round_up(half, 8)
    if tm >= M:
        tm = M                                       # full-dim block is always legal
    return int(tm), int(vmem_limit)


# ----------------------------------------------------------------------------
# pallas_call wrapper
# ----------------------------------------------------------------------------
def _pallas_highway(x2d, w_fused, b_fused, tm, vmem_limit, *, single_buffer_weights):
    M, D = x2d.shape
    grid = (pl.cdiv(M, tm),)

    resident_kw = {}
    if single_buffer_weights:
        # Grid-invariant operands: single-buffer them (halves weight VMEM).
        resident_kw = {"pipeline_mode": pl.Buffered(buffer_count=1)}

    in_specs = [
        pl.BlockSpec((tm, D), lambda i: (i, 0)),                    # x tile (pipelined)
        pl.BlockSpec((D, 2 * D), lambda i: (0, 0), **resident_kw),  # fused weights (resident)
        pl.BlockSpec((1, 2 * D), lambda i: (0, 0), **resident_kw),  # fused bias (resident)
    ]

    return pl.pallas_call(
        _highway_kernel,
        out_shape=jax.ShapeDtypeStruct((M, D), x2d.dtype),
        grid=grid,
        in_specs=in_specs,
        out_specs=pl.BlockSpec((tm, D), lambda i: (i, 0)),
        compiler_params=pltpu.CompilerParams(
            dimension_semantics=("parallel",),
            vmem_limit_bytes=vmem_limit,
        ),
    )(x2d, w_fused, b_fused)


def highway_apply(x, w_fused, b_fused):
    """Highway forward with pre-fused parameters (see prepare_highway_params).

    x : (..., D); leading dims are flattened into rows.
    """
    orig_shape = x.shape
    D = orig_shape[-1]
    x2d = x.reshape(-1, D)
    M = x2d.shape[0]
    assert w_fused.shape == (D, 2 * D), "w_fused must be (D, 2D) = [Wt^T | Wg^T]"
    assert b_fused.shape == (1, 2 * D), "b_fused must be (1, 2D)"

    weight_bytes = w_fused.size * jnp.dtype(w_fused.dtype).itemsize
    bias_bytes = b_fused.size * jnp.dtype(b_fused.dtype).itemsize
    tm, vmem_limit = _choose_tile_and_vmem(M, D, weight_bytes, bias_bytes)

    try:
        out = _pallas_highway(x2d, w_fused, b_fused, tm, vmem_limit,
                              single_buffer_weights=True)
    except Exception:
        # pl.Buffered(1) not accepted by this jax/libtpu build; fall back to
        # default double-buffered resident operands (same math, 2x weight VMEM).
        out = _pallas_highway(x2d, w_fused, b_fused, tm, vmem_limit,
                              single_buffer_weights=False)
    return out.reshape(orig_shape)


def highway_forward(x, w_t, b_t, w_g, b_g, *, compute_dtype=jnp.bfloat16):
    """Convenience wrapper matching the PyTorch module's parameters.

    NOTE: this re-fuses the weights on every call; for repeated calls with
    static weights, call prepare_highway_params once and use highway_apply.
    """
    w_fused, b_fused = prepare_highway_params(w_t, b_t, w_g, b_g,
                                              compute_dtype=compute_dtype)
    return highway_apply(x, w_fused, b_fused)


def highway_reference(x, w_t, b_t, w_g, b_g):
    t = jnp.maximum(x @ w_t.T + b_t, 0.0)
    g = jax.nn.sigmoid(x @ w_g.T + b_g)
    return g * t + (1.0 - g) * x


# ----------------------------------------------------------------------------
# Self-test
# ----------------------------------------------------------------------------
if __name__ == "__main__":
    size = 32

    key = jax.random.PRNGKey(0)
    kx, k1, k2, k3, k4, kx2 = jax.random.split(key, 6)

    # Deterministic "PyTorch-like" uniform(-1/sqrt(size), 1/sqrt(size)) init.
    bound = 1.0 / (size ** 0.5)
    w_t = jax.random.uniform(k1, (size, size), jnp.float32, -bound, bound)
    b_t = jax.random.uniform(k2, (size,), jnp.float32, -bound, bound)
    w_g = jax.random.uniform(k3, (size, size), jnp.float32, -bound, bound)
    b_g = jax.random.uniform(k4, (size,), jnp.float32, -bound, bound)

    # --- exact f32 path, small batch -------------------------------------
    x = jax.random.normal(kx, (8, size), dtype=jnp.float32)
    w_f32, b_fused = prepare_highway_params(w_t, b_t, w_g, b_g,
                                            compute_dtype=jnp.float32)
    out = jax.block_until_ready(highway_apply(x, w_f32, b_fused))
    ref = highway_reference(x, w_t, b_t, w_g, b_g)
    assert out.shape == x.shape and out.dtype == x.dtype
    assert jnp.allclose(out, ref, atol=1e-5, rtol=1e-5), "f32 mismatch (small)"

    # --- exact f32 path, multi-tile batch (partial tile + megacore split) --
    x2 = jax.random.normal(kx2, (300, size), dtype=jnp.float32)
    out2 = jax.block_until_ready(highway_apply(x2, w_f32, b_fused))
    ref2 = highway_reference(x2, w_t, b_t, w_g, b_g)
    assert jnp.allclose(out2, ref2, atol=1e-5, rtol=1e-5), "f32 mismatch (tiled)"

    # --- bf16 fast path (production default: MXU-native, f32 accumulation) -
    w_bf16, b_fused2 = prepare_highway_params(w_t, b_t, w_g, b_g)  # bf16 default
    out_bf = jax.block_until_ready(highway_apply(x2, w_bf16, b_fused2))
    assert out_bf.shape == x2.shape and out_bf.dtype == x2.dtype
    assert jnp.allclose(out_bf, ref2, atol=5e-2, rtol=5e-2), "bf16 mismatch"

    print("KERNEL_OK")
</pallas_src>

<mosaic_0001>
module attributes {stable_mosaic.version = 11 : i64} {
  func.func @_highway_kernel(%arg0: i32, %arg1: memref<8x32xf32, #tpu.memory_space<vmem>>, %arg2: memref<32x64xf32, #tpu.memory_space<vmem>>, %arg3: memref<1x64xf32, #tpu.memory_space<vmem>>, %arg4: memref<8x32xf32, #tpu.memory_space<vmem>>) attributes {dimension_semantics = [#tpu.dimension_semantics<parallel>], iteration_bounds = array<i64: 1>, scalar_prefetch = 0 : i64, scratch_operands = 0 : i64, tpu.core_type = #tpu.core_type<tc>, window_params = [{transform_indices = @transform_0, window_bounds = array<i64: 8, 32>}, {pipeline_mode = #tpu.pipeline_mode<synchronous>, transform_indices = @transform_1, window_bounds = array<i64: 32, 64>}, {pipeline_mode = #tpu.pipeline_mode<synchronous>, transform_indices = @transform_2, window_bounds = array<i64: 1, 64>}, {transform_indices = @transform_3, window_bounds = array<i64: 8, 32>}]} {
    %c0 = arith.constant 0 : index
    %c0_0 = arith.constant 0 : index
    %0 = vector.load %arg1[%c0, %c0_0] : memref<8x32xf32, #tpu.memory_space<vmem>>, vector<8x32xf32>
    %c0_1 = arith.constant 0 : index
    %c0_2 = arith.constant 0 : index
    %1 = vector.load %arg2[%c0_1, %c0_2] : memref<32x64xf32, #tpu.memory_space<vmem>>, vector<32x64xf32>
    %cst = arith.constant dense<0.000000e+00> : vector<8x64xf32>
    %2 = tpu.matmul %0, %1, %cst {dimension_numbers = #tpu.dot_dimension_numbers<[1], [0], [0], [1], [0, 0, 1, 1], [], []>} : vector<8x32xf32>, vector<32x64xf32>, vector<8x64xf32> -> vector<8x64xf32>
    %c0_3 = arith.constant 0 : index
    %c0_4 = arith.constant 0 : index
    %3 = vector.load %arg3[%c0_3, %c0_4] : memref<1x64xf32, #tpu.memory_space<vmem>>, vector<1x64xf32>
    %4 = vector.broadcast %3 : vector<1x64xf32> to vector<8x64xf32>
    %5 = arith.addf %2, %4 : vector<8x64xf32>
    %6 = vector.extract_strided_slice %5 {offsets = [0, 0], sizes = [8, 32], strides = [1, 1]} : vector<8x64xf32> to vector<8x32xf32>
    %cst_5 = arith.constant 0.000000e+00 : f32
    %7 = vector.broadcast %cst_5 : f32 to vector<8x32xf32>
    %8 = arith.maximumf %6, %7 : vector<8x32xf32>
    %9 = vector.extract_strided_slice %5 {offsets = [0, 32], sizes = [8, 32], strides = [1, 1]} : vector<8x64xf32> to vector<8x32xf32>
    %10 = arith.negf %9 : vector<8x32xf32>
    %11 = math.exp %10 : vector<8x32xf32>
    %cst_6 = arith.constant 1.000000e+00 : f32
    %12 = vector.broadcast %cst_6 : f32 to vector<8x32xf32>
    %13 = arith.addf %12, %11 : vector<8x32xf32>
    %14 = arith.divf %12, %13 : vector<8x32xf32>
    %15 = arith.subf %8, %0 : vector<8x32xf32>
    %16 = arith.mulf %14, %15 : vector<8x32xf32>
    %17 = arith.addf %0, %16 : vector<8x32xf32>
    %c0_7 = arith.constant 0 : index
    %c0_8 = arith.constant 0 : index
    %18 = vector.load %arg4[%c0_7, %c0_8] : memref<8x32xf32, #tpu.memory_space<vmem>>, vector<8x32xf32>
    tpu.vector_store %arg4[%c0_7, %c0_8], %17 {strides = array<i32>} : memref<8x32xf32, #tpu.memory_space<vmem>>, vector<8x32xf32>,
    return
  }
  func.func @transform_0(%arg0: i32) -> (i32, i32) {
    %c0_i32 = arith.constant 0 : i32
    %c0_i32_0 = arith.constant 0 : i32
    return %arg0, %c0_i32 : i32, i32
  }
  func.func @transform_1(%arg0: i32) -> (i32, i32) {
    %c0_i32 = arith.constant 0 : i32
    %c0_i32_0 = arith.constant 0 : i32
    %c0_i32_1 = arith.constant 0 : i32
    return %c0_i32, %c0_i32_0 : i32, i32
  }
  func.func @transform_2(%arg0: i32) -> (i32, i32) {
    %c0_i32 = arith.constant 0 : i32
    %c0_i32_0 = arith.constant 0 : i32
    %c0_i32_1 = arith.constant 0 : i32
    return %c0_i32, %c0_i32_0 : i32, i32
  }
  func.func @transform_3(%arg0: i32) -> (i32, i32) {
    %c0_i32 = arith.constant 0 : i32
    %c0_i32_0 = arith.constant 0 : i32
    return %arg0, %c0_i32 : i32, i32
  }
}

module attributes {stable_mosaic.version = 11 : i64} {
  func.func @_highway_kernel(%arg0: i32, %arg1: memref<8x32xf32, #tpu.memory_space<vmem>>, %arg2: memref<32x64xf32, #tpu.memory_space<vmem>>, %arg3: memref<1x64xf32, #tpu.memory_space<vmem>>, %arg4: memref<8x32xf32, #tpu.memory_space<vmem>>) attributes {dimension_semantics = [#tpu.dimension_semantics<parallel>], iteration_bounds = array<i64: 1>, scalar_prefetch = 0 : i64, scratch_operands = 0 : i64, tpu.core_type = #tpu.core_type<tc>, window_params = [{transform_indices = @transform_0, window_bounds = array<i64: 8, 32>}, {pipeline_mode = #tpu.pipeline_mode<synchronous>, transform_indices = @transform_1, window_bounds = array<i64: 32, 64>}, {pipeline_mode = #tpu.pipeline_mode<synchronous>, transform_indices = @transform_2, window_bounds = array<i64: 1, 64>}, {transform_indices = @transform_3, window_bounds = array<i64: 8, 32>}]} {
    %c0 = arith.constant 0 : index
    %c0_0 = arith.constant 0 : index
    %0 = vector.load %arg1[%c0, %c0_0] : memref<8x32xf32, #tpu.memory_space<vmem>>, vector<8x32xf32>
    %c0_1 = arith.constant 0 : index
    %c0_2 = arith.constant 0 : index
    %1 = vector.load %arg2[%c0_1, %c0_2] : memref<32x64xf32, #tpu.memory_space<vmem>>, vector<32x64xf32>
    %cst = arith.constant dense<0.000000e+00> : vector<8x64xf32>
    %2 = tpu.matmul %0, %1, %cst {dimension_numbers = #tpu.dot_dimension_numbers<[1], [0], [0], [1], [0, 0, 1, 1], [], []>} : vector<8x32xf32>, vector<32x64xf32>, vector<8x64xf32> -> vector<8x64xf32>
    %c0_3 = arith.constant 0 : index
    %c0_4 = arith.constant 0 : index
    %3 = vector.load %arg3[%c0_3, %c0_4] : memref<1x64xf32, #tpu.memory_space<vmem>>, vector<1x64xf32>
    %4 = vector.broadcast %3 : vector<1x64xf32> to vector<8x64xf32>
    %5 = arith.addf %2, %4 : vector<8x64xf32>
    %6 = vector.extract_strided_slice %5 {offsets = [0, 0], sizes = [8, 32], strides = [1, 1]} : vector<8x64xf32> to vector<8x32xf32>
    %cst_5 = arith.constant 0.000000e+00 : f32
    %7 = vector.broadcast %cst_5 : f32 to vector<8x32xf32>
    %8 = arith.maximumf %6, %7 : vector<8x32xf32>
    %9 = vector.extract_strided_slice %5 {offsets = [0, 32], sizes = [8, 32], strides = [1, 1]} : vector<8x64xf32> to vector<8x32xf32>
    %10 = arith.negf %9 : vector<8x32xf32>
    %11 = math.exp %10 : vector<8x32xf32>
    %cst_6 = arith.constant 1.000000e+00 : f32
    %12 = vector.broadcast %cst_6 : f32 to vector<8x32xf32>
    %13 = arith.addf %12, %11 : vector<8x32xf32>
    %14 = arith.divf %12, %13 : vector<8x32xf32>
    %15 = arith.subf %8, %0 : vector<8x32xf32>
    %16 = arith.mulf %14, %15 : vector<8x32xf32>
    %17 = arith.addf %0, %16 : vector<8x32xf32>
    %c0_7 = arith.constant 0 : index
    %c0_8 = arith.constant 0 : index
    %18 = vector.load %arg4[%c0_7, %c0_8] : memref<8x32xf32, #tpu.memory_space<vmem>>, vector<8x32xf32>
    tpu.vector_store %arg4[%c0_7, %c0_8], %17 {strides = array<i32>} : memref<8x32xf32, #tpu.memory_space<vmem>>, vector<8x32xf32>,
    return
  }
  func.func @transform_0(%arg0: i32) -> (i32, i32) {
    %c0_i32 = arith.constant 0 : i32
    %c0_i32_0 = arith.constant 0 : i32
    return %arg0, %c0_i32 : i32, i32
  }
  func.func @transform_1(%arg0: i32) -> (i32, i32) {
    %c0_i32 = arith.constant 0 : i32
    %c0_i32_0 = arith.constant 0 : i32
    %c0_i32_1 = arith.constant 0 : i32
    return %c0_i32, %c0_i32_0 : i32, i32
  }
  func.func @transform_2(%arg0: i32) -> (i32, i32) {
    %c0_i32 = arith.constant 0 : i32
    %c0_i32_0 = arith.constant 0 : i32
    %c0_i32_1 = arith.constant 0 : i32
    return %c0_i32, %c0_i32_0 : i32, i32
  }
  func.func @transform_3(%arg0: i32) -> (i32, i32) {
    %c0_i32 = arith.constant 0 : i32
    %c0_i32_0 = arith.constant 0 : i32
    return %arg0, %c0_i32 : i32, i32
  }
}

</mosaic_0001>

<llo_original>
// kernel: tpu_custom_call.1
$region0: #{tpu_custom_call.1}
  #allocation0 [shape = 'u32[]', space=smem, size = 0x4, offset = 0x4, fixed_abs, tag = 'smem constant byte address 0x4 - core index']
  #allocation1 [shape = 'u32[144,128]{1,0:T(1,128)}', space=vmem, size = 0x12000, scoped, tag = 'internal scratch']
  %s0 = inlined_call_operand.hbm [shape: f32[8,32], index: 0, kind: input, shape index: {}]
  %s1 = inlined_call_operand.hbm [shape: f32[32,64], index: 1, kind: input, shape index: {}]
  %s2 = inlined_call_operand.vmem [shape: f32[1,64], index: 2, kind: input, shape index: {}]
  %s3 = inlined_call_operand.hbm [shape: f32[8,32], index: 3, kind: output, shape index: {}]
  %s4 = sld [smem:[#allocation0]]
  $region30: #{tpu_custom_call.1} parent=0
    _
  %s6 = ssub.s32 1, %s4
  %s7 = scalar_select 0, %s6, %s4
  $region1: #{tpu_custom_call.1} parent=0
    #allocation2 [shape = 'u8[4096]{0}', space=vmem, size = 0x1000, scoped, tag = 'input window, operand 0, single buffered']
    #allocation3 [shape = 's32[1]{0}', space=sflag, size = 0x4, scoped, tag = 'scoped memory for tpu_custom_call.1']
    #allocation4 [shape = 's32[1]{0}', space=sflag, size = 0x4, scoped, tag = 'scoped memory for tpu_custom_call.1']
    #allocation5 [shape = 'u8[16384]{0}', space=vmem, size = 0x4000, scoped, tag = 'input window, operand 1, single buffered']
    #allocation6 [shape = 's32[1]{0}', space=sflag, size = 0x4, scoped, tag = 'scoped memory for tpu_custom_call.1']
    #allocation7 [shape = 'u8[4096]{0}', space=vmem, size = 0x1000, scoped, tag = 'output window, operand 0, single buffered']
    %8 = vsyncpa [#allocation3], 0
    %9 = vsyncpa [#allocation6], 0
    %10 = vsyncpa [#allocation4], 0
    // Predicated region
    $region2: #{tpu_custom_call.1} parent=1 // pred_check
      _
    $region3: #{tpu_custom_call.1} parent=1 // pred_check_branch
      %12 = sbr.rel (0) target = $region5
    $region4: #{tpu_custom_call.1} parent=1 // pred_region
      %s14 = ssub.s32 128, 128
      %15 = vsyncadd [#allocation3], %s14
      %s17 = sshll.u32 [#allocation2], 4
      %s18 = int_to_ptr.vmem [resolvable:$true] %s17
      %20 = dma.hbm_to_vmem [thread:$0]  %s0, 128, %s18, [#allocation3]
    $region5: #{tpu_custom_call.1} parent=1 // pred_fallthru
      _
    // Predicated region
    $region6: #{tpu_custom_call.1} parent=1 // pred_check
      _
    $region7: #{tpu_custom_call.1} parent=1 // pred_check_branch
      %22 = sbr.rel (0) target = $region9
    $region8: #{tpu_custom_call.1} parent=1 // pred_region
      %s24 = ssub.s32 512, 512
      %25 = vsyncadd [#allocation6], %s24
      %s26 = sshll.u32 [#allocation5], 4
      %s27 = int_to_ptr.vmem [resolvable:$true] %s26
      %32 = dma.hbm_to_vmem [thread:$0]  %s1, 512, %s27, [#allocation6], 128, 128, 8
    $region9: #{tpu_custom_call.1} parent=1 // pred_fallthru
      _
    // Predicated region
    $region10: #{tpu_custom_call.1} parent=1 // pred_check
      _
    $region11: #{tpu_custom_call.1} parent=1 // pred_check_branch
      %34 = sbr.rel (0) target = $region13
    $region12: #{tpu_custom_call.1} parent=1 // pred_region
      _
    $region13: #{tpu_custom_call.1} parent=1 // pred_fallthru
      _
    // Predicated region
    $region14: #{tpu_custom_call.1} parent=1 // pred_check
      _
    $region15: #{tpu_custom_call.1} parent=1 // pred_check_branch
      %36 = sbr.rel (0) target = $region17
    $region16: #{tpu_custom_call.1} parent=1 // pred_region
      %37 = dma.done [#allocation3], 128
    $region17: #{tpu_custom_call.1} parent=1 // pred_fallthru
      _
    // Predicated region
    $region18: #{tpu_custom_call.1} parent=1 // pred_check
      _
    $region19: #{tpu_custom_call.1} parent=1 // pred_check_branch
      %39 = sbr.rel (0) target = $region21
    $region20: #{tpu_custom_call.1} parent=1 // pred_region
      %40 = dma.done [#allocation6], 512
    $region21: #{tpu_custom_call.1} parent=1 // pred_fallthru
      _
    %v41 = vld [vmem:[#allocation2] sm:$0xff]
    %v42 = vld [vmem:[#allocation5] sm:$0xff]
    %v43 = vld [vmem:[#allocation5 + $0x8] sm:$0xff]
    %v44 = vld [vmem:[#allocation5 + $0x10] sm:$0xff]
    %v45 = vld [vmem:[#allocation5 + $0x18] sm:$0xff]
    %v46 = vld [vmem:[%s2] sm:$0x1]
    %v48 = vlaneseq
    %v49 = vshrl.u32 %v48, 7
    %v50 = vsub.s32 0, %v49
    %v51 = vrot.slane %v46, %v50
    %vm53 = vcmask 261120
    %v55 = vsel %vm53, %v41, 0
    %57 = vmatprep.subr.mxu0 0.0
    %58 = vmatpush1.msra.mxu0 0.0
    %59 = vmatprep.subr.mxu0 0.0
    %60 = vmatpush1.msra.mxu0 0.0
    %61 = vmatprep.subr.mxu0 0.0
    %62 = vmatpush1.msra.mxu0 0.0
    %63 = vmatprep.subr.mxu0 0.0
    %64 = vmatpush1.msra.mxu0 0.0
    %65 = vmatprep.subr.mxu0 0.0
    %66 = vmatpush1.msra.mxu0 0.0
    %67 = vmatprep.subr.mxu0 0.0
    %68 = vmatpush1.msra.mxu0 0.0
    %69 = vmatprep.subr.mxu0 0.0
    %70 = vmatpush1.msra.mxu0 0.0
    %71 = vmatprep.subr.mxu0 0.0
    %72 = vmatpush1.msra.mxu0 0.0
    %73 = vmatprep.subr.mxu0 0.0
    %74 = vmatpush1.msra.mxu0 0.0
    %75 = vmatprep.subr.mxu0 0.0
    %76 = vmatpush1.msra.mxu0 0.0
    %77 = vmatprep.subr.mxu0 0.0
    %78 = vmatpush1.msra.mxu0 0.0
    %79 = vmatprep.subr.mxu0 0.0
    %80 = vmatpush1.msra.mxu0 0.0
    %81 = vmatprep.subr.mxu0 0.0
    %82 = vmatpush1.msra.mxu0 %v45
    %83 = vmatprep.subr.mxu0 0.0
    %84 = vmatpush1.msra.mxu0 %v44
    %85 = vmatprep.subr.mxu0 0.0
    %86 = vmatpush1.msra.mxu0 %v43
    %87 = vmatprep.subr.mxu0 0.0
    %88 = vmatpush1.msra.mxu0 %v42
    %89 = vmatprep.subr.mxu0 0.0
    %90 = vmatpush2.msra.mxu0 0.0
    %91 = vmatprep.subr.mxu0 0.0
    %92 = vmatpush2.msra.mxu0 0.0
    %93 = vmatprep.subr.mxu0 0.0
    %94 = vmatpush2.msra.mxu0 0.0
    %95 = vmatprep.subr.mxu0 0.0
    %96 = vmatpush2.msra.mxu0 0.0
    %97 = vmatprep.subr.mxu0 0.0
    %98 = vmatpush2.msra.mxu0 0.0
    %99 = vmatprep.subr.mxu0 0.0
    %100 = vmatpush2.msra.mxu0 0.0
    %101 = vmatprep.subr.mxu0 0.0
    %102 = vmatpush2.msra.mxu0 0.0
    %103 = vmatprep.subr.mxu0 0.0
    %104 = vmatpush2.msra.mxu0 0.0
    %105 = vmatprep.subr.mxu0 0.0
    %106 = vmatpush2.msra.mxu0 0.0
    %107 = vmatprep.subr.mxu0 0.0
    %108 = vmatpush2.msra.mxu0 0.0
    %109 = vmatprep.subr.mxu0 0.0
    %110 = vmatpush2.msra.mxu0 0.0
    %111 = vmatprep.subr.mxu0 0.0
    %112 = vmatpush2.msra.mxu0 0.0
    %113 = vmatprep.subr.mxu0 0.0
    %114 = vmatpush2.msra.mxu0 0.0
    %115 = vmatprep.subr.mxu0 0.0
    %116 = vmatpush2.msra.mxu0 0.0
    %117 = vmatprep.subr.mxu0 0.0
    %118 = vmatpush2.msra.mxu0 0.0
    %119 = vmatprep.subr.mxu0 0.0
    %120 = vmatpush2.msra.mxu0 0.0
    %121 = vmatprep.mubr.f32.mxu0 0.0
    %122 = vmatmul.mubr.f32.gmra.mxu0 %v55
    %v123 = vpop.f32.mrf.mxu0
    %v124 = vadd.f32 %v51, %v123
    %v125 = vpop.f32.mrf.mxu0
    %126 = vdwg.mxu0
    %v127 = vmax.f32 %v124, 0.0
    %v128 = vxor.u32 %v124, 2147483648
    %v129 = vmul.f32 %v128, 1.442695
    %v130 = vpow.pop %v129
    %v131 = vadd.f32 %v130, 1.0
    %v132 = vrcp.pop %v131
    %v133 = vmul.f32 1.0, %v132
    %v134 = vsub.f32 %v127, %v41
    %136 = vrot.lane.b32.xlu0 %v134, 32
    %v137 = vpop.permute.xlu0 %136
    %v139 = vmul.f32 %v133, %v137
    %141 = vrot.lane.b32.xlu0 %v139, 96
    %v142 = vpop.permute.xlu0 %141
    %v144 = vadd.f32 %v41, %v142
    %145 = vst.msk [vmem:[#allocation7] sm:$0xff] %vm53, %v144
    // Predicated region
    $region22: #{tpu_custom_call.1} parent=1 // pred_check
      _
    $region23: #{tpu_custom_call.1} parent=1 // pred_check_branch
      %147 = sbr.rel (0) target = $region25
    $region24: #{tpu_custom_call.1} parent=1 // pred_region
      %s149 = ssub.s32 128, 128
      %150 = vsyncadd [#allocation4], %s149
      %s152 = sshll.u32 [#allocation7], 4
      %s153 = int_to_ptr.vmem [resolvable:$true] %s152
      %155 = dma.vmem_to_hbm [thread:$0]  %s153, 128, %s3, [#allocation4]
    $region25: #{tpu_custom_call.1} parent=1 // pred_fallthru
      _
    // Predicated region
    $region26: #{tpu_custom_call.1} parent=1 // pred_check
      _
    $region27: #{tpu_custom_call.1} parent=1 // pred_check_branch
      %157 = sbr.rel (0) target = $region29
    $region28: #{tpu_custom_call.1} parent=1 // pred_region
      %158 = dma.done [#allocation4], 128
    $region29: #{tpu_custom_call.1} parent=1 // pred_fallthru
      _
    %159 = vsyncpa [#allocation3], 1
    %160 = vsyncpa [#allocation6], 1
    %161 = vsyncpa [#allocation4], 1

// kernel: tpu_custom_call.1
$region0: #{tpu_custom_call.1}
  #allocation0 [shape = 'u32[]', space=smem, size = 0x4, offset = 0x4, fixed_abs, tag = 'smem constant byte address 0x4 - core index']
  #allocation1 [shape = 'u32[144,128]{1,0:T(1,128)}', space=vmem, size = 0x12000, scoped, tag = 'internal scratch']
  %s0 = inlined_call_operand.hbm [shape: f32[8,32], index: 0, kind: input, shape index: {}]
  %s1 = inlined_call_operand.hbm [shape: f32[32,64], index: 1, kind: input, shape index: {}]
  %s2 = inlined_call_operand.vmem [shape: f32[1,64], index: 2, kind: input, shape index: {}]
  %s3 = inlined_call_operand.hbm [shape: f32[8,32], index: 3, kind: output, shape index: {}]
  %s4 = sld [smem:[#allocation0]]
  $region30: #{tpu_custom_call.1} parent=0
    _
  %s6 = ssub.s32 1, %s4
  %s7 = scalar_select 0, %s6, %s4
  $region1: #{tpu_custom_call.1} parent=0
    #allocation2 [shape = 'u8[4096]{0}', space=vmem, size = 0x1000, scoped, tag = 'input window, operand 0, single buffered']
    #allocation3 [shape = 's32[1]{0}', space=sflag, size = 0x4, scoped, tag = 'scoped memory for tpu_custom_call.1']
    #allocation4 [shape = 's32[1]{0}', space=sflag, size = 0x4, scoped, tag = 'scoped memory for tpu_custom_call.1']
    #allocation5 [shape = 'u8[16384]{0}', space=vmem, size = 0x4000, scoped, tag = 'input window, operand 1, single buffered']
    #allocation6 [shape = 's32[1]{0}', space=sflag, size = 0x4, scoped, tag = 'scoped memory for tpu_custom_call.1']
    #allocation7 [shape = 'u8[4096]{0}', space=vmem, size = 0x1000, scoped, tag = 'output window, operand 0, single buffered']
    %8 = vsyncpa [#allocation3], 0
    %9 = vsyncpa [#allocation6], 0
    %10 = vsyncpa [#allocation4], 0
    // Predicated region
    $region2: #{tpu_custom_call.1} parent=1 // pred_check
      _
    $region3: #{tpu_custom_call.1} parent=1 // pred_check_branch
      %12 = sbr.rel (0) target = $region5
    $region4: #{tpu_custom_call.1} parent=1 // pred_region
      %s14 = ssub.s32 128, 128
      %15 = vsyncadd [#allocation3], %s14
      %s17 = sshll.u32 [#allocation2], 4
      %s18 = int_to_ptr.vmem [resolvable:$true] %s17
      %20 = dma.hbm_to_vmem [thread:$0]  %s0, 128, %s18, [#allocation3]
    $region5: #{tpu_custom_call.1} parent=1 // pred_fallthru
      _
    // Predicated region
    $region6: #{tpu_custom_call.1} parent=1 // pred_check
      _
    $region7: #{tpu_custom_call.1} parent=1 // pred_check_branch
      %22 = sbr.rel (0) target = $region9
    $region8: #{tpu_custom_call.1} parent=1 // pred_region
      %s24 = ssub.s32 512, 512
      %25 = vsyncadd [#allocation6], %s24
      %s26 = sshll.u32 [#allocation5], 4
      %s27 = int_to_ptr.vmem [resolvable:$true] %s26
      %32 = dma.hbm_to_vmem [thread:$0]  %s1, 512, %s27, [#allocation6], 128, 128, 8
    $region9: #{tpu_custom_call.1} parent=1 // pred_fallthru
      _
    // Predicated region
    $region10: #{tpu_custom_call.1} parent=1 // pred_check
      _
    $region11: #{tpu_custom_call.1} parent=1 // pred_check_branch
      %34 = sbr.rel (0) target = $region13
    $region12: #{tpu_custom_call.1} parent=1 // pred_region
      _
    $region13: #{tpu_custom_call.1} parent=1 // pred_fallthru
      _
    // Predicated region
    $region14: #{tpu_custom_call.1} parent=1 // pred_check
      _
    $region15: #{tpu_custom_call.1} parent=1 // pred_check_branch
      %36 = sbr.rel (0) target = $region17
    $region16: #{tpu_custom_call.1} parent=1 // pred_region
      %37 = dma.done [#allocation3], 128
    $region17: #{tpu_custom_call.1} parent=1 // pred_fallthru
      _
    // Predicated region
    $region18: #{tpu_custom_call.1} parent=1 // pred_check
      _
    $region19: #{tpu_custom_call.1} parent=1 // pred_check_branch
      %39 = sbr.rel (0) target = $region21
    $region20: #{tpu_custom_call.1} parent=1 // pred_region
      %40 = dma.done [#allocation6], 512
    $region21: #{tpu_custom_call.1} parent=1 // pred_fallthru
      _
    %v41 = vld [vmem:[#allocation2] sm:$0xff]
    %v42 = vld [vmem:[#allocation5] sm:$0xff]
    %v43 = vld [vmem:[#allocation5 + $0x8] sm:$0xff]
    %v44 = vld [vmem:[#allocation5 + $0x10] sm:$0xff]
    %v45 = vld [vmem:[#allocation5 + $0x18] sm:$0xff]
    %v46 = vld [vmem:[%s2] sm:$0x1]
    %v48 = vlaneseq
    %v49 = vshrl.u32 %v48, 7
    %v50 = vsub.s32 0, %v49
    %v51 = vrot.slane %v46, %v50
    %vm53 = vcmask 261120
    %v55 = vsel %vm53, %v41, 0
    %57 = vmatprep.subr.mxu0 0.0
    %58 = vmatpush1.msra.mxu0 0.0
    %59 = vmatprep.subr.mxu0 0.0
    %60 = vmatpush1.msra.mxu0 0.0
    %61 = vmatprep.subr.mxu0 0.0
    %62 = vmatpush1.msra.mxu0 0.0
    %63 = vmatprep.subr.mxu0 0.0
    %64 = vmatpush1.msra.mxu0 0.0
    %65 = vmatprep.subr.mxu0 0.0
    %66 = vmatpush1.msra.mxu0 0.0
    %67 = vmatprep.subr.mxu0 0.0
    %68 = vmatpush1.msra.mxu0 0.0
    %69 = vmatprep.subr.mxu0 0.0
    %70 = vmatpush1.msra.mxu0 0.0
    %71 = vmatprep.subr.mxu0 0.0
    %72 = vmatpush1.msra.mxu0 0.0
    %73 = vmatprep.subr.mxu0 0.0
    %74 = vmatpush1.msra.mxu0 0.0
    %75 = vmatprep.subr.mxu0 0.0
    %76 = vmatpush1.msra.mxu0 0.0
    %77 = vmatprep.subr.mxu0 0.0
    %78 = vmatpush1.msra.mxu0 0.0
    %79 = vmatprep.subr.mxu0 0.0
    %80 = vmatpush1.msra.mxu0 0.0
    %81 = vmatprep.subr.mxu0 0.0
    %82 = vmatpush1.msra.mxu0 %v45
    %83 = vmatprep.subr.mxu0 0.0
    %84 = vmatpush1.msra.mxu0 %v44
    %85 = vmatprep.subr.mxu0 0.0
    %86 = vmatpush1.msra.mxu0 %v43
    %87 = vmatprep.subr.mxu0 0.0
    %88 = vmatpush1.msra.mxu0 %v42
    %89 = vmatprep.subr.mxu0 0.0
    %90 = vmatpush2.msra.mxu0 0.0
    %91 = vmatprep.subr.mxu0 0.0
    %92 = vmatpush2.msra.mxu0 0.0
    %93 = vmatprep.subr.mxu0 0.0
    %94 = vmatpush2.msra.mxu0 0.0
    %95 = vmatprep.subr.mxu0 0.0
    %96 = vmatpush2.msra.mxu0 0.0
    %97 = vmatprep.subr.mxu0 0.0
    %98 = vmatpush2.msra.mxu0 0.0
    %99 = vmatprep.subr.mxu0 0.0
    %100 = vmatpush2.msra.mxu0 0.0
    %101 = vmatprep.subr.mxu0 0.0
    %102 = vmatpush2.msra.mxu0 0.0
    %103 = vmatprep.subr.mxu0 0.0
    %104 = vmatpush2.msra.mxu0 0.0
    %105 = vmatprep.subr.mxu0 0.0
    %106 = vmatpush2.msra.mxu0 0.0
    %107 = vmatprep.subr.mxu0 0.0
    %108 = vmatpush2.msra.mxu0 0.0
    %109 = vmatprep.subr.mxu0 0.0
    %110 = vmatpush2.msra.mxu0 0.0
    %111 = vmatprep.subr.mxu0 0.0
    %112 = vmatpush2.msra.mxu0 0.0
    %113 = vmatprep.subr.mxu0 0.0
    %114 = vmatpush2.msra.mxu0 0.0
    %115 = vmatprep.subr.mxu0 0.0
    %116 = vmatpush2.msra.mxu0 0.0
    %117 = vmatprep.subr.mxu0 0.0
    %118 = vmatpush2.msra.mxu0 0.0
    %119 = vmatprep.subr.mxu0 0.0
    %120 = vmatpush2.msra.mxu0 0.0
    %121 = vmatprep.mubr.f32.mxu0 0.0
    %122 = vmatmul.mubr.f32.gmra.mxu0 %v55
    %v123 = vpop.f32.mrf.mxu0
    %v124 = vadd.f32 %v51, %v123
    %v125 = vpop.f32.mrf.mxu0
    %126 = vdwg.mxu0
    %v127 = vmax.f32 %v124, 0.0
    %v128 = vxor.u32 %v124, 2147483648
    %v129 = vmul.f32 %v128, 1.442695
    %v130 = vpow.pop %v129
    %v131 = vadd.f32 %v130, 1.0
    %v132 = vrcp.pop %v131
    %v133 = vmul.f32 1.0, %v132
    %v134 = vsub.f32 %v127, %v41
    %136 = vrot.lane.b32.xlu0 %v134, 32
    %v137 = vpop.permute.xlu0 %136
    %v139 = vmul.f32 %v133, %v137
    %141 = vrot.lane.b32.xlu0 %v139, 96
    %v142 = vpop.permute.xlu0 %141
    %v144 = vadd.f32 %v41, %v142
    %145 = vst.msk [vmem:[#allocation7] sm:$0xff] %vm53, %v144
    // Predicated region
    $region22: #{tpu_custom_call.1} parent=1 // pred_check
      _
    $region23: #{tpu_custom_call.1} parent=1 // pred_check_branch
      %147 = sbr.rel (0) target = $region25
    $region24: #{tpu_custom_call.1} parent=1 // pred_region
      %s149 = ssub.s32 128, 128
      %150 = vsyncadd [#allocation4], %s149
      %s152 = sshll.u32 [#allocation7], 4
      %s153 = int_to_ptr.vmem [resolvable:$true] %s152
      %155 = dma.vmem_to_hbm [thread:$0]  %s153, 128, %s3, [#allocation4]
    $region25: #{tpu_custom_call.1} parent=1 // pred_fallthru
      _
    // Predicated region
    $region26: #{tpu_custom_call.1} parent=1 // pred_check
      _
    $region27: #{tpu_custom_call.1} parent=1 // pred_check_branch
      %157 = sbr.rel (0) target = $region29
    $region28: #{tpu_custom_call.1} parent=1 // pred_region
      %158 = dma.done [#allocation4], 128
    $region29: #{tpu_custom_call.1} parent=1 // pred_fallthru
      _
    %159 = vsyncpa [#allocation3], 1
    %160 = vsyncpa [#allocation6], 1
    %161 = vsyncpa [#allocation4], 1

</llo_original>
